<compile_context>
chip_gen: v7x
topology: tpu7x:2x2x1
jax: 0.10.0
libtpu: 0.0.40
codegen_flags: <defaults>
</compile_context>

<pallas_src>
import functools

import jax
import jax.numpy as jnp
from jax.experimental import pallas as pl
from jax.experimental.pallas import tpu as pltpu


def _round_up(a, m):
    return (a + m - 1) // m * m


def _layernorm_kernel(x_ref, w_ref, b_ref, o_ref, *, eps, d):
    # x_ref: (TM, D) tile of flattened tokens; w_ref/b_ref: (1, D) affine params.
    # NOTE: rows past the true token count (partial last tile) hold undefined
    # data; they are computed row-locally and write-masked, never reduced over.
    x = x_ref[...].astype(jnp.float32)                          # (TM, D)

    # Fused single-pass statistics (both reductions read x directly).
    s1 = jnp.sum(x, axis=-1, keepdims=True)                     # (TM, 1)
    s2 = jnp.sum(x * x, axis=-1, keepdims=True)                 # (TM, 1)
    mean = s1 * (1.0 / d)
    # PyTorch torch.std defaults to the unbiased estimator (ddof = 1).
    var = (s2 - d * mean * mean) * (1.0 / (d - 1.0))
    var = jnp.maximum(var, 0.0)                                 # guard cancellation
    std = jnp.sqrt(var)

    # Per-row reciprocal ((TM,1), cheap) instead of a full (TM,D) divide.
    # approx=False keeps the 1e-4 tolerance comfortably; still row-sized work.
    inv = pl.reciprocal(std + eps, approx=False)                # (TM, 1)

    y = w_ref[...] * ((x - mean) * inv) + b_ref[...]
    o_ref[...] = y.astype(o_ref.dtype)


def encoder_forward(x, weight, bias, eps=1e-6, tile_rows=1024):
    """Encoder.forward.  x: (B, S, D); weight/bias: (D,) LayerNorm params."""
    # TODO(synk): the N deep-copied EncoderLayer submodules (`layer` ctor arg)
    # are not defined in the spec, so the layer stack is applied as identity;
    # only the final custom LayerNorm is lowered to Pallas.  The forget_gates
    # (SemanticMap/tsne) are unused in Encoder.forward and are omitted.
    B, S, D = x.shape
    N = B * S
    x_flat = x.reshape(N, D)

    # Sublane-dense row tiles: TM multiple of 8, D (=512) is lane-aligned.
    if N > tile_rows:
        TM = tile_rows
    else:
        # Small problems: aim for >=2 grid steps so the "parallel" axis can
        # actually feed both TensorCores on v7x.
        TM = max(8, _round_up(pl.cdiv(N, 2), 8))
    grid = (pl.cdiv(N, TM),)   # partial last tile handled by Pallas masking

    w2 = weight.reshape(1, D).astype(jnp.float32)
    b2 = bias.reshape(1, D).astype(jnp.float32)

    out_flat = pl.pallas_call(
        functools.partial(_layernorm_kernel, eps=float(eps), d=float(D)),
        out_shape=jax.ShapeDtypeStruct((N, D), x.dtype),
        grid=grid,
        in_specs=[
            pl.BlockSpec((TM, D), lambda i: (i, 0)),   # token tile
            pl.BlockSpec((1, D), lambda i: (0, 0)),    # weight (resident)
            pl.BlockSpec((1, D), lambda i: (0, 0)),    # bias   (resident)
        ],
        out_specs=pl.BlockSpec((TM, D), lambda i: (i, 0)),
        compiler_params=pltpu.CompilerParams(
            dimension_semantics=("parallel",),          # independent row tiles
        ),
    )(x_flat, w2, b2)

    return out_flat.reshape(B, S, D)


def _ref_encoder(x, weight, bias, eps=1e-6):
    mean = jnp.mean(x, axis=-1, keepdims=True)
    std = jnp.std(x, axis=-1, keepdims=True, ddof=1)
    return weight * (x - mean) / (std + eps) + bias


if __name__ == "__main__":
    # Small deterministic setup consistent with Encoder(layer, N): the model
    # width is 512 (LayerNorm(layer.size) with layer.size = 512 in base_cmn).
    d_model = 512
    B, S = 2, 8

    key = jax.random.PRNGKey(0)
    k_x, k_w, k_b = jax.random.split(key, 3)

    x = jax.random.normal(k_x, (B, S, d_model), dtype=jnp.float32)
    # LayerNorm params init to ones/zeros; perturb so the affine path is tested.
    weight = 1.0 + 0.1 * jax.random.normal(k_w, (d_model,), dtype=jnp.float32)
    bias = 0.1 * jax.random.normal(k_b, (d_model,), dtype=jnp.float32)

    out = encoder_forward(x, weight, bias)
    out = jax.block_until_ready(out)

    ref = _ref_encoder(x, weight, bias)
    assert out.shape == (B, S, d_model)
    assert jnp.allclose(out, ref, atol=1e-4, rtol=1e-4)

    print("KERNEL_OK")
</pallas_src>

<mosaic_0001>
module attributes {stable_mosaic.version = 11 : i64} {
  func.func @_layernorm_kernel(%arg0: i32, %arg1: memref<8x512xf32, #tpu.memory_space<vmem>>, %arg2: memref<1x512xf32, #tpu.memory_space<vmem>>, %arg3: memref<1x512xf32, #tpu.memory_space<vmem>>, %arg4: memref<8x512xf32, #tpu.memory_space<vmem>>) attributes {dimension_semantics = [#tpu.dimension_semantics<parallel>], iteration_bounds = array<i64: 2>, scalar_prefetch = 0 : i64, scratch_operands = 0 : i64, tpu.core_type = #tpu.core_type<tc>, window_params = [{transform_indices = @transform_0, window_bounds = array<i64: 8, 512>}, {pipeline_mode = #tpu.pipeline_mode<synchronous>, transform_indices = @transform_1, window_bounds = array<i64: 1, 512>}, {pipeline_mode = #tpu.pipeline_mode<synchronous>, transform_indices = @transform_2, window_bounds = array<i64: 1, 512>}, {transform_indices = @transform_3, window_bounds = array<i64: 8, 512>}]} {
    %c0 = arith.constant 0 : index
    %c0_0 = arith.constant 0 : index
    %0 = vector.load %arg1[%c0, %c0_0] : memref<8x512xf32, #tpu.memory_space<vmem>>, vector<8x512xf32>
    %cst = arith.constant dense<0.000000e+00> : vector<8xf32>
    %1 = vector.multi_reduction <add>, %0, %cst [1] : vector<8x512xf32> to vector<8xf32>
    %2 = vector.shape_cast %1 : vector<8xf32> to vector<8x1xf32>
    %3 = arith.mulf %0, %0 : vector<8x512xf32>
    %cst_1 = arith.constant dense<0.000000e+00> : vector<8xf32>
    %4 = vector.multi_reduction <add>, %3, %cst_1 [1] : vector<8x512xf32> to vector<8xf32>
    %5 = vector.shape_cast %4 : vector<8xf32> to vector<8x1xf32>
    %cst_2 = arith.constant 0.001953125 : f32
    %6 = vector.broadcast %cst_2 : f32 to vector<8x1xf32>
    %7 = arith.mulf %2, %6 : vector<8x1xf32>
    %cst_3 = arith.constant 5.120000e+02 : f32
    %8 = vector.broadcast %cst_3 : f32 to vector<8x1xf32>
    %9 = arith.mulf %8, %7 : vector<8x1xf32>
    %10 = arith.mulf %9, %7 : vector<8x1xf32>
    %11 = arith.subf %5, %10 : vector<8x1xf32>
    %cst_4 = arith.constant 0.00195694715 : f32
    %12 = vector.broadcast %cst_4 : f32 to vector<8x1xf32>
    %13 = arith.mulf %11, %12 : vector<8x1xf32>
    %cst_5 = arith.constant 0.000000e+00 : f32
    %14 = vector.broadcast %cst_5 : f32 to vector<8x1xf32>
    %15 = arith.maximumf %13, %14 : vector<8x1xf32>
    %16 = math.sqrt %15 : vector<8x1xf32>
    %cst_6 = arith.constant 9.99999997E-7 : f32
    %17 = vector.broadcast %cst_6 : f32 to vector<8x1xf32>
    %18 = arith.addf %16, %17 : vector<8x1xf32>
    %19 = tpu.reciprocal %18 : vector<8x1xf32> -> vector<8x1xf32>
    %c0_7 = arith.constant 0 : index
    %c0_8 = arith.constant 0 : index
    %20 = vector.load %arg2[%c0_7, %c0_8] : memref<1x512xf32, #tpu.memory_space<vmem>>, vector<1x512xf32>
    %21 = vector.broadcast %7 : vector<8x1xf32> to vector<8x512xf32>
    %22 = arith.subf %0, %21 : vector<8x512xf32>
    %23 = vector.broadcast %19 : vector<8x1xf32> to vector<8x512xf32>
    %24 = arith.mulf %22, %23 : vector<8x512xf32>
    %25 = vector.broadcast %20 : vector<1x512xf32> to vector<8x512xf32>
    %26 = arith.mulf %25, %24 : vector<8x512xf32>
    %c0_9 = arith.constant 0 : index
    %c0_10 = arith.constant 0 : index
    %27 = vector.load %arg3[%c0_9, %c0_10] : memref<1x512xf32, #tpu.memory_space<vmem>>, vector<1x512xf32>
    %28 = vector.broadcast %27 : vector<1x512xf32> to vector<8x512xf32>
    %29 = arith.addf %26, %28 : vector<8x512xf32>
    %c0_11 = arith.constant 0 : index
    %c0_12 = arith.constant 0 : index
    %30 = vector.load %arg4[%c0_11, %c0_12] : memref<8x512xf32, #tpu.memory_space<vmem>>, vector<8x512xf32>
    tpu.vector_store %arg4[%c0_11, %c0_12], %29 {strides = array<i32>} : memref<8x512xf32, #tpu.memory_space<vmem>>, vector<8x512xf32>,
    return
  }
  func.func @transform_0(%arg0: i32) -> (i32, i32) {
    %c0_i32 = arith.constant 0 : i32
    %c0_i32_0 = arith.constant 0 : i32
    return %arg0, %c0_i32 : i32, i32
  }
  func.func @transform_1(%arg0: i32) -> (i32, i32) {
    %c0_i32 = arith.constant 0 : i32
    %c0_i32_0 = arith.constant 0 : i32
    %c0_i32_1 = arith.constant 0 : i32
    return %c0_i32, %c0_i32_0 : i32, i32
  }
  func.func @transform_2(%arg0: i32) -> (i32, i32) {
    %c0_i32 = arith.constant 0 : i32
    %c0_i32_0 = arith.constant 0 : i32
    %c0_i32_1 = arith.constant 0 : i32
    return %c0_i32, %c0_i32_0 : i32, i32
  }
  func.func @transform_3(%arg0: i32) -> (i32, i32) {
    %c0_i32 = arith.constant 0 : i32
    %c0_i32_0 = arith.constant 0 : i32
    return %arg0, %c0_i32 : i32, i32
  }
}

</mosaic_0001>

<llo_original>
// kernel: tpu_custom_call.1
$region0: #{tpu_custom_call.1}
  #allocation0 [shape = 'u32[]', space=smem, size = 0x4, offset = 0x4, fixed_abs, tag = 'smem constant byte address 0x4 - core index']
  #allocation1 [shape = 'u32[144,128]{1,0:T(1,128)}', space=vmem, size = 0x12000, scoped, tag = 'internal scratch']
  %s0 = inlined_call_operand.hbm [shape: f32[16,512], index: 0, kind: input, shape index: {}]
  %s1 = inlined_call_operand.hbm [shape: f32[1,512], index: 1, kind: input, shape index: {}]
  %s2 = inlined_call_operand.vmem [shape: f32[1,512], index: 2, kind: input, shape index: {}]
  %s3 = inlined_call_operand.hbm [shape: f32[16,512], index: 3, kind: output, shape index: {}]
  %s4 = sld [smem:[#allocation0]]
  $region53: #{tpu_custom_call.1} parent=0
    _
  %s6 = ssub.s32 1, %s4
  %s7 = scalar_select 0, %s6, %s4
  $region1: #{tpu_custom_call.1} parent=0
    #allocation2 [shape = 'u8[32768]{0}', space=vmem, size = 0x8000, scoped, tag = 'input window, operand 0']
    #allocation3 [shape = 's32[2]{0}', space=sflag, size = 0x8, scoped, tag = 'scoped memory for tpu_custom_call.1']
    #allocation4 [shape = 's32[2]{0}', space=sflag, size = 0x8, scoped, tag = 'scoped memory for tpu_custom_call.1']
    #allocation5 [shape = 'u8[2048]{0}', space=vmem, size = 0x800, scoped, tag = 'input window, operand 1, single buffered']
    #allocation6 [shape = 's32[1]{0}', space=sflag, size = 0x4, scoped, tag = 'scoped memory for tpu_custom_call.1']
    #allocation7 [shape = 'u8[32768]{0}', space=vmem, size = 0x8000, scoped, tag = 'output window, operand 0']
    %8 = vsyncpa [#allocation3], 0
    %s9 = scalar_lea.sflag [#allocation3], 1
    %10 = vsyncpa %s9, 0
    %11 = vsyncpa [#allocation6], 0
    %12 = vsyncpa [#allocation4], 0
    %s13 = scalar_lea.sflag [#allocation4], 1
    %14 = vsyncpa %s13, 0
    loop: start=0, step=1, limit=4
    $region2: #{tpu_custom_call.1} parent=1 // loop_pre_header
      _
    $region3: #{tpu_custom_call.1} parent=1 // loop_header
      %s16 = sphi 0, %s20
      %p17 = scmp.ge.s32.totalorder %s16, 4
      %s26 = sphi 0, %s28
      %s29 = sphi 0, %s26
      %s30 = sphi 0, %s29
      %s46 = sphi 0, %s30
      %s50 = sphi 0, %s50
      %s52 = sphi 0, %s50
      %s53 = sphi 0, %s52
      %s67 = sphi 0, %s53
      %s71 = sphi 0, %s71
      %s73 = sphi 0, %s71
      %s74 = sphi 0, %s73
      %s88 = sphi 0, %s74
      %s94 = sphi 0, %s96
      %s97 = sphi 0, %s94
      %s98 = sphi 0, %s97
      %s114 = sphi 0, %s98
    $region4: #{tpu_custom_call.1} parent=1 // loop_header_branch
      %19 = sbr.rel (%p17) target = $region8
    $region5: #{tpu_custom_call.1} parent=1 // loop_body
      %s21 = ssub.s32 %s16, 1
      %s22 = ssub.s32 %s16, 2
      %s23 = sadd.s32 %s16, 1
      %s24 = ssub.s32 %s16, %s23
      %p25 = scmp.eq.s32.totalorder %s24, 0
      %s27 = sadd.s32 %s26, 1
      %s28 = scalar_select %p25, %s26, %s27
      %p31 = pneg %p25
      %p32 = scmp.eq.s32.totalorder %s16, 1
      %p33 = por %p31, %p32
      %p34 = scmp.ne.s32.totalorder %s26, %s29
      %p35 = scmp.eq.s32.totalorder %s16, 0
      %p36 = por %p34, %p35
      %p37 = scmp.ne.s32.totalorder %s26, %s29
      %p38 = scmp.eq.s32.totalorder %s21, 1
      %p39 = por %p37, %p38
      %p40 = scmp.ne.s32.totalorder %s29, %s30
      %p41 = scmp.eq.s32.totalorder %s21, 0
      %p42 = por %p40, %p41
      %p43 = scmp.ne.s32.totalorder %s29, %s30
      %p44 = scmp.eq.s32.totalorder %s22, 1
      %p45 = por %p43, %p44
      %p47 = scmp.ne.s32.totalorder %s30, %s46
      %p48 = scmp.eq.s32.totalorder %s22, 0
      %p49 = por %p47, %p48
      %s51 = sadd.s32 %s50, 1
      %p54 = scmp.eq.s32.totalorder %s16, 1
      %p55 = scmp.ne.s32.totalorder %s50, %s52
      %p56 = scmp.eq.s32.totalorder %s16, 0
      %p57 = por %p55, %p56
      %p58 = scmp.ne.s32.totalorder %s50, %s52
      %p59 = scmp.eq.s32.totalorder %s21, 1
      %p60 = por %p58, %p59
      %p61 = scmp.ne.s32.totalorder %s52, %s53
      %p62 = scmp.eq.s32.totalorder %s21, 0
      %p63 = por %p61, %p62
      %p64 = scmp.ne.s32.totalorder %s52, %s53
      %p65 = scmp.eq.s32.totalorder %s22, 1
      %p66 = por %p64, %p65
      %p68 = scmp.ne.s32.totalorder %s53, %s67
      %p69 = scmp.eq.s32.totalorder %s22, 0
      %p70 = por %p68, %p69
      %s72 = sadd.s32 %s71, 1
      %p75 = scmp.eq.s32.totalorder %s16, 1
      %p76 = scmp.ne.s32.totalorder %s71, %s73
      %p77 = scmp.eq.s32.totalorder %s16, 0
      %p78 = por %p76, %p77
      %p79 = scmp.ne.s32.totalorder %s71, %s73
      %p80 = scmp.eq.s32.totalorder %s21, 1
      %p81 = por %p79, %p80
      %p82 = scmp.ne.s32.totalorder %s73, %s74
      %p83 = scmp.eq.s32.totalorder %s21, 0
      %p84 = por %p82, %p83
      %p85 = scmp.ne.s32.totalorder %s73, %s74
      %p86 = scmp.eq.s32.totalorder %s22, 1
      %p87 = por %p85, %p86
      %p89 = scmp.ne.s32.totalorder %s74, %s88
      %p90 = scmp.eq.s32.totalorder %s22, 0
      %p91 = por %p89, %p90
      %s92 = ssub.s32 %s16, %s23
      %p93 = scmp.eq.s32.totalorder %s92, 0
      %s95 = sadd.s32 %s94, 1
      %s96 = scalar_select %p93, %s94, %s95
      %p99 = pneg %p93
      %p100 = scmp.eq.s32.totalorder %s16, 1
      %p101 = por %p99, %p100
      %p102 = scmp.ne.s32.totalorder %s94, %s97
      %p103 = scmp.eq.s32.totalorder %s16, 0
      %p104 = por %p102, %p103
      %p105 = scmp.ne.s32.totalorder %s94, %s97
      %p106 = scmp.eq.s32.totalorder %s21, 1
      %p107 = por %p105, %p106
      %p108 = scmp.ne.s32.totalorder %s97, %s98
      %p109 = scmp.eq.s32.totalorder %s21, 0
      %p110 = por %p108, %p109
      %p111 = scmp.ne.s32.totalorder %s97, %s98
      %p112 = scmp.eq.s32.totalorder %s22, 1
      %p113 = por %p111, %p112
      %p115 = scmp.ne.s32.totalorder %s98, %s114
      %p116 = scmp.eq.s32.totalorder %s22, 0
      %p117 = por %p115, %p116
      %p118 = scmp.le.s32.totalorder 1, %s16
      %p119 = scmp.lt.s32.totalorder %s16, 3
      %p120 = pnand %p118, %p119
      %p121 = pneg %p120
      // Predicated region
      $region9: #{tpu_custom_call.1} parent=5 // pred_check
        _
      $region10: #{tpu_custom_call.1} parent=5 // pred_check_branch
        %123 = sbr.rel (%p120) target = $region12
      $region11: #{tpu_custom_call.1} parent=5 // pred_region
        %s124 = ssub.s32 %s16, 1
        // Predicated region
        $region13: #{tpu_custom_call.1} parent=11 // pred_check
          %p125 = pneg %p63
        $region14: #{tpu_custom_call.1} parent=11 // pred_check_branch
          %127 = sbr.rel (%p125) target = $region16
        $region15: #{tpu_custom_call.1} parent=11 // pred_region
          %s129 = ssub.s32 64, 64
          %130 = vsyncadd [#allocation6], %s129
          %s132 = sshll.u32 [#allocation5], 4
          %s133 = int_to_ptr.vmem [resolvable:$true] %s132
          %135 = dma.hbm_to_vmem [thread:$0]  %s1, 64, %s133, [#allocation6]
        $region16: #{tpu_custom_call.1} parent=11 // pred_fallthru
          _
        // Predicated region
        $region17: #{tpu_custom_call.1} parent=11 // pred_check
          %p136 = pneg %p84
        $region18: #{tpu_custom_call.1} parent=11 // pred_check_branch
          %138 = sbr.rel (%p136) target = $region20
        $region19: #{tpu_custom_call.1} parent=11 // pred_region
          _
        $region20: #{tpu_custom_call.1} parent=11 // pred_fallthru
          _
      $region12: #{tpu_custom_call.1} parent=5 // pred_fallthru
        _
      %p139 = scmp.lt.s32.totalorder %s16, 2
      // Predicated region
      $region21: #{tpu_custom_call.1} parent=5 // pred_check
        %p140 = pneg %p139
      $region22: #{tpu_custom_call.1} parent=5 // pred_check_branch
        %142 = sbr.rel (%p140) target = $region24
      $region23: #{tpu_custom_call.1} parent=5 // pred_region
        // Predicated region
        $region25: #{tpu_custom_call.1} parent=23 // pred_check
          %p143 = pneg %p36
        $region26: #{tpu_custom_call.1} parent=23 // pred_check_branch
          %145 = sbr.rel (%p143) target = $region28
        $region27: #{tpu_custom_call.1} parent=23 // pred_region
          %s146 = sand.u32 %s26, 1
          %s147 = scalar_lea.sflag [#allocation3], %s146
          %s148 = sand.u32 %s26, 1
          %s149 = smul.addr %s148, 32
          %s150 = scalar_lea.vmem [#allocation2], %s149
          %s152 = ssub.s32 512, 512
          %153 = vsyncadd %s147, %s152
          %s154 = smul.addr %s16, 4
          %s155 = smul.addr %s154, 128
          %s156 = scalar_lea.hbm %s0, %s155
          %s158 = sshll.u32 %s150, 4
          %s159 = int_to_ptr.vmem [resolvable:$true] %s158
          %161 = dma.hbm_to_vmem [thread:$0]  %s156, 512, %s159, %s147
        $region28: #{tpu_custom_call.1} parent=23 // pred_fallthru
          _
      $region24: #{tpu_custom_call.1} parent=5 // pred_fallthru
        _
      %p162 = scmp.le.s32.totalorder 1, %s16
      %p163 = scmp.lt.s32.totalorder %s16, 3
      %p164 = pnand %p162, %p163
      %p165 = pneg %p164
      // Predicated region
      $region29: #{tpu_custom_call.1} parent=5 // pred_check
        _
      $region30: #{tpu_custom_call.1} parent=5 // pred_check_branch
        %167 = sbr.rel (%p164) target = $region32
      $region31: #{tpu_custom_call.1} parent=5 // pred_region
        %s168 = ssub.s32 %s16, 1
        %s169 = sand.u32 %s29, 1
        %s170 = scalar_lea.sflag [#allocation3], %s169
        %s171 = sand.u32 %s29, 1
        %s172 = smul.addr %s171, 32
        %s173 = scalar_lea.vmem [#allocation2], %s172
        // Predicated region
        $region33: #{tpu_custom_call.1} parent=31 // pred_check
          %p174 = pneg %p42
        $region34: #{tpu_custom_call.1} parent=31 // pred_check_branch
          %176 = sbr.rel (%p174) target = $region36
        $region35: #{tpu_custom_call.1} parent=31 // pred_region
          %177 = dma.done %s170, 512
        $region36: #{tpu_custom_call.1} parent=31 // pred_fallthru
          _
        // Predicated region
        $region37: #{tpu_custom_call.1} parent=31 // pred_check
          %p178 = pneg %p63
        $region38: #{tpu_custom_call.1} parent=31 // pred_check_branch
          %180 = sbr.rel (%p178) target = $region40
        $region39: #{tpu_custom_call.1} parent=31 // pred_region
          %181 = dma.done [#allocation6], 64
        $region40: #{tpu_custom_call.1} parent=31 // pred_fallthru
          _
        %s182 = sand.u32 %s29, 1
        %s183 = scalar_lea.sflag [#allocation3], %s182
        %s184 = sand.u32 %s29, 1
        %s185 = smul.addr %s184, 32
        %s186 = scalar_lea.vmem [#allocation2], %s185
        %p187 = pneg %p42
        %p188 = pneg %p39
        %p189 = pneg %p63
        %p190 = pneg %p60
        %p191 = pneg %p84
        %p192 = pneg %p81
        %p193 = pneg %p110
        %p194 = pneg %p107
        %s195 = sand.u32 %s97, 1
        %s196 = scalar_lea.sflag [#allocation4], %s195
        %s197 = sand.u32 %s97, 1
        %s198 = smul.addr %s197, 32
        %s199 = scalar_lea.vmem [#allocation7], %s198
        %v200 = vld [vmem:[%s173] sm:$0xff]
        %v201 = vld [vmem:[%s173 + $0x8] sm:$0xff]
        %v202 = vld [vmem:[%s173 + $0x10] sm:$0xff]
        %v203 = vld [vmem:[%s173 + $0x18] sm:$0xff]
        %v204 = vadd.f32 %v200, %v201
        %v205 = vadd.f32 %v204, %v202
        %v206 = vadd.f32 %v205, %v203
        %207 = vadd.xlane.f32.xlu0 %v206
        %v208 = vpop.xlane.xlu0 %207
        %v209 = vmul.f32 %v200, %v200
        %v210 = vmul.f32 %v201, %v201
        %v211 = vmul.f32 %v202, %v202
        %v212 = vmul.f32 %v203, %v203
        %v213 = vadd.f32 %v209, %v210
        %v214 = vadd.f32 %v213, %v211
        %v215 = vadd.f32 %v214, %v212
        %216 = vadd.xlane.f32.xlu0 %v215
        %v217 = vpop.xlane.xlu0 %216
        %v218 = vmul.f32 %v208, 0.001953125
        %v219 = vmul.f32 %v218, 512.0
        %v220 = vmul.f32 %v219, %v218
        %v221 = vsub.f32 %v217, %v220
        %v222 = vmul.f32 %v221, 0.0019569471
        %v223 = vmax.f32 %v222, 0.0
        %v224 = vrsqrt.pop %v223
        %v225 = vmul.f32 %v223, %v224
        %vm226 = vcmp.eq.f32.partialorder %v223, inf
        %v227 = vsel %vm226, %v223, %v225
        %vm228 = vcmp.eq.f32.partialorder %v223, 0.0
        %v229 = vand.u32 %v223, 2147483648
        %v230 = vsel %vm228, %v229, %v227
        %v231 = vadd.f32 %v230, 1e-06
        %v232 = vrcp.pop %v231
        %v233 = vld [vmem:[#allocation5] sm:$0xf]
        %v234 = vsub.f32 %v200, %v218
        %v235 = vsub.f32 %v201, %v218
        %v236 = vsub.f32 %v202, %v218
        %v237 = vsub.f32 %v203, %v218
        %v238 = vmul.f32 %v234, %v232
        %v239 = vmul.f32 %v235, %v232
        %v240 = vmul.f32 %v236, %v232
        %v241 = vmul.f32 %v237, %v232
        %v243 = vlaneseq
        %v244 = vshrl.u32 %v243, 7
        %v245 = vsub.s32 0, %v244
        %v246 = vrot.slane %v233, %v245
        %v247 = vlaneseq
        %v248 = vshrl.u32 %v247, 7
        %v249 = vsub.s32 1, %v248
        %v250 = vrot.slane %v233, %v249
        %v251 = vlaneseq
        %v252 = vshrl.u32 %v251, 7
        %v253 = vsub.s32 2, %v252
        %v254 = vrot.slane %v233, %v253
        %v255 = vlaneseq
        %v256 = vshrl.u32 %v255, 7
        %v257 = vsub.s32 3, %v256
        %v258 = vrot.slane %v233, %v257
        %v263 = vmul.f32 %v246, %v238
        %v264 = vmul.f32 %v250, %v239
        %v265 = vmul.f32 %v254, %v240
        %v266 = vmul.f32 %v258, %v241
        %v267 = vld [vmem:[%s2] sm:$0xf]
        %v269 = vlaneseq
        %v270 = vshrl.u32 %v269, 7
        %v271 = vsub.s32 0, %v270
        %v272 = vrot.slane %v267, %v271
        %v273 = vlaneseq
        %v274 = vshrl.u32 %v273, 7
        %v275 = vsub.s32 1, %v274
        %v276 = vrot.slane %v267, %v275
        %v277 = vlaneseq
        %v278 = vshrl.u32 %v277, 7
        %v279 = vsub.s32 2, %v278
        %v280 = vrot.slane %v267, %v279
        %v281 = vlaneseq
        %v282 = vshrl.u32 %v281, 7
        %v283 = vsub.s32 3, %v282
        %v284 = vrot.slane %v267, %v283
        %v289 = vadd.f32 %v263, %v272
        %v290 = vadd.f32 %v264, %v276
        %v291 = vadd.f32 %v265, %v280
        %v292 = vadd.f32 %v266, %v284
        %293 = vst [vmem:[%s199] sm:$0xff] %v289
        %294 = vst [vmem:[%s199 + $0x8] sm:$0xff] %v290
        %295 = vst [vmem:[%s199 + $0x10] sm:$0xff] %v291
        %296 = vst [vmem:[%s199 + $0x18] sm:$0xff] %v292
        %s297 = sand.u32 %s97, 1
        %s298 = scalar_lea.sflag [#allocation4], %s297
        %s299 = sand.u32 %s97, 1
        %s300 = smul.addr %s299, 32
        %s301 = scalar_lea.vmem [#allocation7], %s300
        // Predicated region
        $region41: #{tpu_custom_call.1} parent=31 // pred_check
          %p302 = pneg %p107
        $region42: #{tpu_custom_call.1} parent=31 // pred_check_branch
          %304 = sbr.rel (%p302) target = $region44
        $region43: #{tpu_custom_call.1} parent=31 // pred_region
          %s306 = ssub.s32 512, 512
          %307 = vsyncadd %s298, %s306
          %s308 = smul.addr %s21, 4
          %s309 = smul.addr %s308, 128
          %s310 = scalar_lea.hbm %s3, %s309
          %s312 = sshll.u32 %s301, 4
          %s313 = int_to_ptr.vmem [resolvable:$true] %s312
          %315 = dma.vmem_to_hbm [thread:$0]  %s313, 512, %s310, %s298
        $region44: #{tpu_custom_call.1} parent=31 // pred_fallthru
          _
      $region32: #{tpu_custom_call.1} parent=5 // pred_fallthru
        _
      %p316 = scmp.le.s32.totalorder 2, %s16
      // Predicated region
      $region45: #{tpu_custom_call.1} parent=5 // pred_check
        %p317 = pneg %p316
      $region46: #{tpu_custom_call.1} parent=5 // pred_check_branch
        %319 = sbr.rel (%p317) target = $region48
      $region47: #{tpu_custom_call.1} parent=5 // pred_region
        %s320 = ssub.s32 %s16, 2
        // Predicated region
        $region49: #{tpu_custom_call.1} parent=47 // pred_check
          %p321 = pneg %p113
        $region50: #{tpu_custom_call.1} parent=47 // pred_check_branch
          %323 = sbr.rel (%p321) target = $region52
        $region51: #{tpu_custom_call.1} parent=47 // pred_region
          %s324 = sand.u32 %s98, 1
          %s325 = scalar_lea.sflag [#allocation4], %s324
          %s326 = sand.u32 %s98, 1
          %s327 = smul.addr %s326, 32
          %s328 = scalar_lea.vmem [#allocation7], %s327
          %329 = dma.done %s325, 512
        $region52: #{tpu_custom_call.1} parent=47 // pred_fallthru
          _
      $region48: #{tpu_custom_call.1} parent=5 // pred_fallthru
        _
    $region6: #{tpu_custom_call.1} parent=1 // loop_footer
      %s20 = sadd.s32 1, %s16
    $region7: #{tpu_custom_call.1} parent=1 // loop_footer_branch
      %15 = sbr.rel target = $region3
    $region8: #{tpu_custom_call.1} parent=1 // loop_exit
      _
    %330 = vsyncpa [#allocation3], 1
    %s331 = scalar_lea.sflag [#allocation3], 1
    %332 = vsyncpa %s331, 1
    %333 = vsyncpa [#allocation6], 1
    %334 = vsyncpa [#allocation4], 1
    %s335 = scalar_lea.sflag [#allocation4], 1
    %336 = vsyncpa %s335, 1

</llo_original>
